<compile_context>
chip_gen: v5e
topology: v5e:2x2
jax: 0.10.0
libtpu: 0.0.40
codegen_flags: <defaults>
</compile_context>

<pallas_src>
import functools

import jax
import jax.numpy as jnp
from jax import lax
from jax.experimental import pallas as pl
from jax.experimental.pallas import tpu as pltpu


def _round_up(x, m):
    return ((x + m - 1) // m) * m


# ---------------- fused kernel ----------------

def _make_fused_mlp_kernel(num_layers, out_size):
    """Builds kernel(x_ref, w0, b0, w1, b1, ..., out_ref).

    All Linear layers, the ReLU chain, and the final (masked) LogSoftmax are
    fused; intermediate activations never leave the core.
    """

    def kernel(x_ref, *refs):
        out_ref = refs[-1]
        wb_refs = refs[:-1]

        h = x_ref[...]  # (TB, in_f) bf16 -- already cast on the host side
        for l in range(num_layers):
            w = wb_refs[2 * l][...]       # (in_l, out_pad_l) bf16
            b = wb_refs[2 * l + 1][...]   # (1, out_pad_l) f32
            # bf16 operands on the MXU, f32 accumulation; epilogue stays f32.
            y = jnp.dot(h, w, preferred_element_type=jnp.float32) + b
            if l < num_layers - 1:
                # ReLU in f32, carry the activation in bf16 (halves vreg use).
                h = jnp.maximum(y, 0.0).astype(jnp.bfloat16)
            else:
                # Masked, max-stabilized log-softmax over the real columns:
                # padded lanes are forced to -inf so exp(.) contributes 0.
                col = lax.broadcasted_iota(jnp.int32, y.shape, 1)
                ym = jnp.where(col < out_size, y, -jnp.inf)
                m = jnp.max(ym, axis=-1, keepdims=True)
                s = ym - m
                lse = jnp.log(jnp.sum(jnp.exp(s), axis=-1, keepdims=True))
                # Store 0.0 (not -inf) in the padded lanes -> finite buffer.
                out_ref[...] = jnp.where(col < out_size, s - lse, 0.0)

    return kernel


def fused_mlp_forward(x, *, weights, biases, out_size, block_b=512):
    """x: (B, input_size) f32.
    weights[0]: (input_size, out_pad_0) bf16 (K unpadded).
    weights[i>0]: (in_pad_i, out_pad_i) bf16, 128-padded.
    biases[i]:  (1, out_pad_i) f32, zero-padded.
    Returns (B, out_size) f32 log-probabilities."""
    B, in_f = x.shape
    assert in_f == weights[0].shape[0]
    out_pad = weights[-1].shape[1]
    num_layers = len(weights)

    # Batch tile: multiple of 16 sublanes (bf16 packing), capped at block_b.
    tb = min(block_b, _round_up(B, 16))
    # Prefer >= 2 grid steps when the batch allows, so the "parallel" batch
    # axis can actually shard across v7x's two TensorCores.
    if pl.cdiv(B, tb) < 2 and tb >= 32:
        tb = _round_up(pl.cdiv(tb, 2), 16)
    b_pad = _round_up(B, tb)

    # Feed x as bf16; pad only the ragged batch tail (no copy if B % tb == 0,
    # and no lane padding of the feature dim at all).
    x_bf = x.astype(jnp.bfloat16)
    if b_pad != B:
        xp = jnp.zeros((b_pad, in_f), jnp.bfloat16).at[:B].set(x_bf)
    else:
        xp = x_bf

    in_specs = [pl.BlockSpec((tb, in_f), lambda i: (i, 0))]
    flat = []
    for w, b in zip(weights, biases):
        # Constant index_map -> weights/biases stay VMEM-resident across steps.
        in_specs.append(pl.BlockSpec(w.shape, lambda i: (0, 0)))
        in_specs.append(pl.BlockSpec(b.shape, lambda i: (0, 0)))
        flat += [w, b]

    # Scaling guard for the all-weights-resident strategy (see TODO above).
    resident_bytes = (sum(w.size * 2 for w in weights)
                      + sum(b.size * 4 for b in biases))
    stream_bytes = 2 * (tb * in_f * 2 + tb * out_pad * 4)  # double-buffered I/O
    vmem_limit = int(min(64 * 1024 * 1024,
                         max(32 * 1024 * 1024,
                             4 * (resident_bytes + stream_bytes))))

    flops = 2 * b_pad * sum(w.shape[0] * w.shape[1] for w in weights)
    bytes_accessed = (xp.size * 2
                      + resident_bytes
                      + b_pad * out_pad * 4)
    cost = pl.CostEstimate(flops=flops,
                           transcendentals=b_pad * out_pad,
                           bytes_accessed=bytes_accessed)

    out = pl.pallas_call(
        _make_fused_mlp_kernel(num_layers, out_size),
        out_shape=jax.ShapeDtypeStruct((b_pad, out_pad), jnp.float32),
        grid=(b_pad // tb,),
        in_specs=in_specs,
        out_specs=pl.BlockSpec((tb, out_pad), lambda i: (i, 0)),
        compiler_params=pltpu.CompilerParams(
            dimension_semantics=("parallel",),   # shard batch tiles across TCs
            vmem_limit_bytes=vmem_limit),
        cost_estimate=cost,
    )(xp, *flat)

    if b_pad != B:
        out = out[:B]
    return out[:, :out_size]


# ---------------- module wrapper ----------------

class NeuralNetworkPallas:
    """JAX/Pallas equivalent of the PyTorch NeuralNetwork module (forward pass)."""

    def __init__(self, input_size, hidden_layers, output_size, key, block_b=512):
        sizes = [input_size] + list(hidden_layers) + [output_size]
        self.output_size = output_size
        self.params = []  # unpadded f32 (in, out) params, used for the reference
        ws, bs = [], []
        for i in range(len(sizes) - 1):
            fan_in, fan_out = sizes[i], sizes[i + 1]
            key, kw, kb = jax.random.split(key, 3)
            # Deterministic init matching nn.Linear's U(-1/sqrt(fan_in), +1/sqrt(fan_in)).
            bound = 1.0 / jnp.sqrt(fan_in)
            # Store W as (in, out) so the kernel computes x @ W.
            w = jax.random.uniform(kw, (fan_in, fan_out), jnp.float32, -bound, bound)
            b = jax.random.uniform(kb, (1, fan_out), jnp.float32, -bound, bound)
            self.params.append((w, b))

            # Lane-dense zero-padded copies: weights bf16, biases f32.
            # First layer keeps its K dim unpadded (x blocks use the full last
            # dim); hidden/output dims are padded to 128-lane multiples.
            in_pad = fan_in if i == 0 else _round_up(fan_in, 128)
            out_pad = _round_up(fan_out, 128)
            wp = (jnp.zeros((in_pad, out_pad), jnp.bfloat16)
                  .at[:fan_in, :fan_out].set(w.astype(jnp.bfloat16)))
            bp = jnp.zeros((1, out_pad), jnp.float32).at[:, :fan_out].set(b)
            ws.append(wp)
            bs.append(bp)

        self._weights = tuple(ws)
        self._biases = tuple(bs)
        self._forward = jax.jit(functools.partial(
            fused_mlp_forward,
            weights=self._weights, biases=self._biases,
            out_size=output_size, block_b=block_b))

    def __call__(self, x):
        return self._forward(x)


# ---------------- reference (pure jnp, same bf16 matmul precision) ----------------

def _reference_forward(params, x):
    n = len(params)
    h = x
    for i, (w, b) in enumerate(params):
        y = jnp.dot(h.astype(jnp.bfloat16), w.astype(jnp.bfloat16),
                    preferred_element_type=jnp.float32) + b
        if i < n - 1:
            h = jnp.maximum(y, 0.0)
        else:
            h = jax.nn.log_softmax(y, axis=1)
    return h


if __name__ == "__main__":
    key = jax.random.PRNGKey(0)
    k_model, k_x = jax.random.split(key)

    batch = 8
    input_size = 32
    hidden_layers = [64, 32]
    output_size = 16

    model = NeuralNetworkPallas(input_size, hidden_layers, output_size, k_model)
    x = jax.random.normal(k_x, (batch, input_size), jnp.float32)

    out = jax.block_until_ready(model(x))
    ref = _reference_forward(model.params, x)

    assert out.shape == (batch, output_size)
    assert bool(jnp.all(jnp.isfinite(out)))
    assert jnp.allclose(out, ref, atol=1e-2, rtol=1e-2), "mismatch vs reference"

    print("KERNEL_OK")
</pallas_src>

<mosaic_0001>
module attributes {stable_mosaic.version = 11 : i64} {
  func.func @kernel(%arg0: i32, %arg1: memref<16x32xbf16, #tpu.memory_space<vmem>>, %arg2: memref<32x128xbf16, #tpu.memory_space<vmem>>, %arg3: memref<1x128xf32, #tpu.memory_space<vmem>>, %arg4: memref<128x128xbf16, #tpu.memory_space<vmem>>, %arg5: memref<1x128xf32, #tpu.memory_space<vmem>>, %arg6: memref<128x128xbf16, #tpu.memory_space<vmem>>, %arg7: memref<1x128xf32, #tpu.memory_space<vmem>>, %arg8: memref<16x128xf32, #tpu.memory_space<vmem>>) attributes {dimension_semantics = [#tpu.dimension_semantics<parallel>], iteration_bounds = array<i64: 1>, scalar_prefetch = 0 : i64, scratch_operands = 0 : i64, tpu.core_type = #tpu.core_type<tc>, window_params = [{transform_indices = @transform_0, window_bounds = array<i64: 16, 32>}, {pipeline_mode = #tpu.pipeline_mode<synchronous>, transform_indices = @transform_1, window_bounds = array<i64: 32, 128>}, {pipeline_mode = #tpu.pipeline_mode<synchronous>, transform_indices = @transform_2, window_bounds = array<i64: 1, 128>}, {pipeline_mode = #tpu.pipeline_mode<synchronous>, transform_indices = @transform_3, window_bounds = array<i64: 128, 128>}, {pipeline_mode = #tpu.pipeline_mode<synchronous>, transform_indices = @transform_4, window_bounds = array<i64: 1, 128>}, {pipeline_mode = #tpu.pipeline_mode<synchronous>, transform_indices = @transform_5, window_bounds = array<i64: 128, 128>}, {pipeline_mode = #tpu.pipeline_mode<synchronous>, transform_indices = @transform_6, window_bounds = array<i64: 1, 128>}, {transform_indices = @transform_7, window_bounds = array<i64: 16, 128>}]} {
    %c0 = arith.constant 0 : index
    %c0_0 = arith.constant 0 : index
    %0 = vector.load %arg1[%c0, %c0_0] : memref<16x32xbf16, #tpu.memory_space<vmem>>, vector<16x32xbf16>
    %c0_1 = arith.constant 0 : index
    %c0_2 = arith.constant 0 : index
    %1 = vector.load %arg2[%c0_1, %c0_2] : memref<32x128xbf16, #tpu.memory_space<vmem>>, vector<32x128xbf16>
    %c0_3 = arith.constant 0 : index
    %c0_4 = arith.constant 0 : index
    %2 = vector.load %arg3[%c0_3, %c0_4] : memref<1x128xf32, #tpu.memory_space<vmem>>, vector<1x128xf32>
    %cst = arith.constant dense<0.000000e+00> : vector<16x128xf32>
    %3 = tpu.matmul %0, %1, %cst {dimension_numbers = #tpu.dot_dimension_numbers<[1], [0], [0], [1], [0, 0, 1, 1], [], []>} : vector<16x32xbf16>, vector<32x128xbf16>, vector<16x128xf32> -> vector<16x128xf32>
    %4 = vector.broadcast %2 : vector<1x128xf32> to vector<16x128xf32>
    %5 = arith.addf %3, %4 : vector<16x128xf32>
    %cst_5 = arith.constant 0.000000e+00 : f32
    %6 = vector.broadcast %cst_5 : f32 to vector<16x128xf32>
    %7 = arith.maximumf %5, %6 : vector<16x128xf32>
    %8 = arith.truncf %7 : vector<16x128xf32> to vector<16x128xbf16>
    %c0_6 = arith.constant 0 : index
    %c0_7 = arith.constant 0 : index
    %9 = vector.load %arg4[%c0_6, %c0_7] : memref<128x128xbf16, #tpu.memory_space<vmem>>, vector<128x128xbf16>
    %c0_8 = arith.constant 0 : index
    %c0_9 = arith.constant 0 : index
    %10 = vector.load %arg5[%c0_8, %c0_9] : memref<1x128xf32, #tpu.memory_space<vmem>>, vector<1x128xf32>
    %cst_10 = arith.constant dense<0.000000e+00> : vector<16x128xf32>
    %11 = tpu.matmul %8, %9, %cst_10 {dimension_numbers = #tpu.dot_dimension_numbers<[1], [0], [0], [1], [0, 0, 1, 1], [], []>} : vector<16x128xbf16>, vector<128x128xbf16>, vector<16x128xf32> -> vector<16x128xf32>
    %12 = vector.broadcast %10 : vector<1x128xf32> to vector<16x128xf32>
    %13 = arith.addf %11, %12 : vector<16x128xf32>
    %cst_11 = arith.constant 0.000000e+00 : f32
    %14 = vector.broadcast %cst_11 : f32 to vector<16x128xf32>
    %15 = arith.maximumf %13, %14 : vector<16x128xf32>
    %16 = arith.truncf %15 : vector<16x128xf32> to vector<16x128xbf16>
    %c0_12 = arith.constant 0 : index
    %c0_13 = arith.constant 0 : index
    %17 = vector.load %arg6[%c0_12, %c0_13] : memref<128x128xbf16, #tpu.memory_space<vmem>>, vector<128x128xbf16>
    %c0_14 = arith.constant 0 : index
    %c0_15 = arith.constant 0 : index
    %18 = vector.load %arg7[%c0_14, %c0_15] : memref<1x128xf32, #tpu.memory_space<vmem>>, vector<1x128xf32>
    %cst_16 = arith.constant dense<0.000000e+00> : vector<16x128xf32>
    %19 = tpu.matmul %16, %17, %cst_16 {dimension_numbers = #tpu.dot_dimension_numbers<[1], [0], [0], [1], [0, 0, 1, 1], [], []>} : vector<16x128xbf16>, vector<128x128xbf16>, vector<16x128xf32> -> vector<16x128xf32>
    %20 = vector.broadcast %18 : vector<1x128xf32> to vector<16x128xf32>
    %21 = arith.addf %19, %20 : vector<16x128xf32>
    %22 = tpu.iota {dimensions = array<i32: 1>} : vector<16x128xi32>
    %c16_i32 = arith.constant 16 : i32
    %23 = vector.broadcast %c16_i32 : i32 to vector<16x128xi32>
    %24 = arith.cmpi slt, %22, %23 : vector<16x128xi32>
    %cst_17 = arith.constant 0xFF800000 : f32
    %25 = vector.broadcast %cst_17 : f32 to vector<16x128xf32>
    %26 = arith.select %24, %21, %25 : vector<16x128xi1>, vector<16x128xf32>
    %cst_18 = arith.constant dense<0xFF800000> : vector<16xf32>
    %27 = vector.multi_reduction <maximumf>, %26, %cst_18 [1] : vector<16x128xf32> to vector<16xf32>
    %28 = vector.shape_cast %27 : vector<16xf32> to vector<16x1xf32>
    %29 = vector.broadcast %28 : vector<16x1xf32> to vector<16x128xf32>
    %30 = arith.subf %26, %29 : vector<16x128xf32>
    %31 = math.exp %30 : vector<16x128xf32>
    %cst_19 = arith.constant dense<0.000000e+00> : vector<16xf32>
    %32 = vector.multi_reduction <add>, %31, %cst_19 [1] : vector<16x128xf32> to vector<16xf32>
    %33 = vector.shape_cast %32 : vector<16xf32> to vector<16x1xf32>
    %34 = math.log %33 : vector<16x1xf32>
    %c16_i32_20 = arith.constant 16 : i32
    %35 = vector.broadcast %c16_i32_20 : i32 to vector<16x128xi32>
    %36 = arith.cmpi slt, %22, %35 : vector<16x128xi32>
    %37 = vector.broadcast %34 : vector<16x1xf32> to vector<16x128xf32>
    %38 = arith.subf %30, %37 : vector<16x128xf32>
    %cst_21 = arith.constant 0.000000e+00 : f32
    %39 = vector.broadcast %cst_21 : f32 to vector<16x128xf32>
    %40 = arith.select %36, %38, %39 : vector<16x128xi1>, vector<16x128xf32>
    %c0_22 = arith.constant 0 : index
    %c0_23 = arith.constant 0 : index
    %41 = vector.load %arg8[%c0_22, %c0_23] : memref<16x128xf32, #tpu.memory_space<vmem>>, vector<16x128xf32>
    tpu.vector_store %arg8[%c0_22, %c0_23], %40 {strides = array<i32>} : memref<16x128xf32, #tpu.memory_space<vmem>>, vector<16x128xf32>,
    return
  }
  func.func @transform_0(%arg0: i32) -> (i32, i32) {
    %c0_i32 = arith.constant 0 : i32
    %c0_i32_0 = arith.constant 0 : i32
    return %arg0, %c0_i32 : i32, i32
  }
  func.func @transform_1(%arg0: i32) -> (i32, i32) {
    %c0_i32 = arith.constant 0 : i32
    %c0_i32_0 = arith.constant 0 : i32
    %c0_i32_1 = arith.constant 0 : i32
    return %c0_i32, %c0_i32_0 : i32, i32
  }
  func.func @transform_2(%arg0: i32) -> (i32, i32) {
    %c0_i32 = arith.constant 0 : i32
    %c0_i32_0 = arith.constant 0 : i32
    %c0_i32_1 = arith.constant 0 : i32
    return %c0_i32, %c0_i32_0 : i32, i32
  }
  func.func @transform_3(%arg0: i32) -> (i32, i32) {
    %c0_i32 = arith.constant 0 : i32
    %c0_i32_0 = arith.constant 0 : i32
    %c0_i32_1 = arith.constant 0 : i32
    return %c0_i32, %c0_i32_0 : i32, i32
  }
  func.func @transform_4(%arg0: i32) -> (i32, i32) {
    %c0_i32 = arith.constant 0 : i32
    %c0_i32_0 = arith.constant 0 : i32
    %c0_i32_1 = arith.constant 0 : i32
    return %c0_i32, %c0_i32_0 : i32, i32
  }
  func.func @transform_5(%arg0: i32) -> (i32, i32) {
    %c0_i32 = arith.constant 0 : i32
    %c0_i32_0 = arith.constant 0 : i32
    %c0_i32_1 = arith.constant 0 : i32
    return %c0_i32, %c0_i32_0 : i32, i32
  }
  func.func @transform_6(%arg0: i32) -> (i32, i32) {
    %c0_i32 = arith.constant 0 : i32
    %c0_i32_0 = arith.constant 0 : i32
    %c0_i32_1 = arith.constant 0 : i32
    return %c0_i32, %c0_i32_0 : i32, i32
  }
  func.func @transform_7(%arg0: i32) -> (i32, i32) {
    %c0_i32 = arith.constant 0 : i32
    %c0_i32_0 = arith.constant 0 : i32
    return %arg0, %c0_i32 : i32, i32
  }
}

</mosaic_0001>

<llo_original>
// kernel: fused_mlp_forward.1
$region0: #{fused_mlp_forward.1}
  #allocation0 [shape = 'u32[]', space=smem, size = 0x4, offset = 0x4, fixed_abs, tag = 'smem constant byte address 0x4 - core index']
  #allocation1 [shape = 'u32[72,128]{1,0:T(1,128)}', space=vmem, size = 0x9000, scoped, tag = 'internal scratch']
  %s0 = inlined_call_operand.vmem [shape: bf16[16,32], index: 0, kind: input, shape index: {}]
  %s1 = inlined_call_operand.vmem [shape: bf16[32,128], index: 1, kind: input, shape index: {}]
  %s2 = inlined_call_operand.vmem [shape: f32[1,128], index: 2, kind: input, shape index: {}]
  %s3 = inlined_call_operand.hbm [shape: bf16[128,128], index: 3, kind: input, shape index: {}]
  %s4 = inlined_call_operand.vmem [shape: f32[1,128], index: 4, kind: input, shape index: {}]
  %s5 = inlined_call_operand.hbm [shape: bf16[128,128], index: 5, kind: input, shape index: {}]
  %s6 = inlined_call_operand.vmem [shape: f32[1,128], index: 6, kind: input, shape index: {}]
  %s7 = inlined_call_operand.vmem [shape: f32[16,128], index: 7, kind: output, shape index: {}]
  %s8 = sld [smem:[#allocation0]]
  $region46: #{fused_mlp_forward.1} parent=0
    _
  %s10 = ssub.s32 1, %s8
  %s11 = scalar_select 0, %s10, %s8
  $region1: #{fused_mlp_forward.1} parent=0
    #allocation2 [shape = 'u8[32768]{0}', space=vmem, size = 0x8000, scoped, tag = 'input window, operand 3, single buffered']
    #allocation3 [shape = 's32[1]{0}', space=sflag, size = 0x4, scoped, tag = 'scoped memory for fused_mlp_forward.1']
    #allocation4 [shape = 'u8[32768]{0}', space=vmem, size = 0x8000, scoped, tag = 'input window, operand 5, single buffered']
    #allocation5 [shape = 's32[1]{0}', space=sflag, size = 0x4, scoped, tag = 'scoped memory for fused_mlp_forward.1']
    %12 = vsyncpa [#allocation3], 0
    %13 = vsyncpa [#allocation5], 0
    // Predicated region
    $region2: #{fused_mlp_forward.1} parent=1 // pred_check
      _
    $region3: #{fused_mlp_forward.1} parent=1 // pred_check_branch
      %15 = sbr.rel (0) target = $region5
    $region4: #{fused_mlp_forward.1} parent=1 // pred_region
      _
    $region5: #{fused_mlp_forward.1} parent=1 // pred_fallthru
      _
    // Predicated region
    $region6: #{fused_mlp_forward.1} parent=1 // pred_check
      _
    $region7: #{fused_mlp_forward.1} parent=1 // pred_check_branch
      %17 = sbr.rel (0) target = $region9
    $region8: #{fused_mlp_forward.1} parent=1 // pred_region
      _
    $region9: #{fused_mlp_forward.1} parent=1 // pred_fallthru
      _
    // Predicated region
    $region10: #{fused_mlp_forward.1} parent=1 // pred_check
      _
    $region11: #{fused_mlp_forward.1} parent=1 // pred_check_branch
      %19 = sbr.rel (0) target = $region13
    $region12: #{fused_mlp_forward.1} parent=1 // pred_region
      _
    $region13: #{fused_mlp_forward.1} parent=1 // pred_fallthru
      _
    // Predicated region
    $region14: #{fused_mlp_forward.1} parent=1 // pred_check
      _
    $region15: #{fused_mlp_forward.1} parent=1 // pred_check_branch
      %21 = sbr.rel (0) target = $region17
    $region16: #{fused_mlp_forward.1} parent=1 // pred_region
      %23 = vsyncadd [#allocation3], 0
      %s24 = sshll.u32 %s3, 4
      %s25 = int_to_ptr.hbm [resolvable:$true] %s24
      %s26 = sshll.u32 [#allocation2], 4
      %s27 = int_to_ptr.vmem [resolvable:$true] %s26
      %32 = dma.hbm_to_vmem [thread:$0]  %s25, 1024, %s27, [#allocation3], 64, 64, 4
    $region17: #{fused_mlp_forward.1} parent=1 // pred_fallthru
      _
    // Predicated region
    $region18: #{fused_mlp_forward.1} parent=1 // pred_check
      _
    $region19: #{fused_mlp_forward.1} parent=1 // pred_check_branch
      %34 = sbr.rel (0) target = $region21
    $region20: #{fused_mlp_forward.1} parent=1 // pred_region
      _
    $region21: #{fused_mlp_forward.1} parent=1 // pred_fallthru
      _
    // Predicated region
    $region22: #{fused_mlp_forward.1} parent=1 // pred_check
      _
    $region23: #{fused_mlp_forward.1} parent=1 // pred_check_branch
      %36 = sbr.rel (0) target = $region25
    $region24: #{fused_mlp_forward.1} parent=1 // pred_region
      %38 = vsyncadd [#allocation5], 0
      %s39 = sshll.u32 %s5, 4
      %s40 = int_to_ptr.hbm [resolvable:$true] %s39
      %s41 = sshll.u32 [#allocation4], 4
      %s42 = int_to_ptr.vmem [resolvable:$true] %s41
      %47 = dma.hbm_to_vmem [thread:$0]  %s40, 1024, %s42, [#allocation5], 64, 64, 4
    $region25: #{fused_mlp_forward.1} parent=1 // pred_fallthru
      _
    // Predicated region
    $region26: #{fused_mlp_forward.1} parent=1 // pred_check
      _
    $region27: #{fused_mlp_forward.1} parent=1 // pred_check_branch
      %49 = sbr.rel (0) target = $region29
    $region28: #{fused_mlp_forward.1} parent=1 // pred_region
      _
    $region29: #{fused_mlp_forward.1} parent=1 // pred_fallthru
      _
    // Predicated region
    $region30: #{fused_mlp_forward.1} parent=1 // pred_check
      _
    $region31: #{fused_mlp_forward.1} parent=1 // pred_check_branch
      %51 = sbr.rel (0) target = $region33
    $region32: #{fused_mlp_forward.1} parent=1 // pred_region
      %53 = dma.done [#allocation3], 1024
    $region33: #{fused_mlp_forward.1} parent=1 // pred_fallthru
      _
    // Predicated region
    $region34: #{fused_mlp_forward.1} parent=1 // pred_check
      _
    $region35: #{fused_mlp_forward.1} parent=1 // pred_check_branch
      %55 = sbr.rel (0) target = $region37
    $region36: #{fused_mlp_forward.1} parent=1 // pred_region
      %57 = dma.done [#allocation5], 1024
    $region37: #{fused_mlp_forward.1} parent=1 // pred_fallthru
      _
    %v59 = vld [vmem:[%s0] sm:$0xf]
    %v60 = vld [vmem:[%s0 + $0x4] sm:$0xf]
    %v61 = vld [vmem:[%s1] sm:$0xf]
    %v62 = vld [vmem:[%s1 + $0x4] sm:$0xf]
    %v63 = vld [vmem:[%s1 + $0x8] sm:$0xf]
    %v64 = vld [vmem:[%s1 + $0xc] sm:$0xf]
    %v65 = vld [vmem:[%s2] sm:$0x1]
    %v67 = vperm.slane %v65, 0
    %v71 = vunpack.c.l.b16 %v59
    %v72 = vunpack.c.l.b16 %v60
    %v73 = vpack.c.b16 %v72, %v71
    %v78 = vunpack.c.l.b16 %v61
    %v79 = vunpack.c.l.b16 %v62
    %v80 = vunpack.c.l.b16 %v63
    %v81 = vunpack.c.l.b16 %v64
    %v82 = vpack.c.b16 %v79, %v78
    %v83 = vpack.c.b16 %v81, %v80
    %vm86 = vcmask 261120
    %v88 = vsel %vm86, %v73, 0
    %90 = vmatpush.bf16.msra.mxu0 0
    %91 = vmatpush.bf16.msra.mxu0 0
    %92 = vmatpush.bf16.msra.mxu0 0
    %93 = vmatpush.bf16.msra.mxu0 0
    %94 = vmatpush.bf16.msra.mxu0 0
    %95 = vmatpush.bf16.msra.mxu0 0
    %96 = vmatpush.bf16.msra.mxu0 %v83
    %97 = vmatpush.bf16.msra.mxu0 %v82
    %98 = vmatmul.bf16.gmra.mxu0 %v88
    %v99 = vpop.f32.mrf.mxu0
    %v100 = vadd.f32 %v67, %v99
    %v101 = vpop.f32.mrf.mxu0
    %v102 = vadd.f32 %v67, %v101
    %103 = vdwg.mxu0
    %v104 = vmax.f32 %v100, 0.0
    %v105 = vmax.f32 %v102, 0.0
    %v106 = vpack.c.bf16 %v105, %v104
    %v107 = vld [vmem:[#allocation2] sm:$0xf]
    %v108 = vld [vmem:[#allocation2 + $0x4] sm:$0xf]
    %v109 = vld [vmem:[#allocation2 + $0x8] sm:$0xf]
    %v110 = vld [vmem:[#allocation2 + $0xc] sm:$0xf]
    %v111 = vld [vmem:[#allocation2 + $0x10] sm:$0xf]
    %v112 = vld [vmem:[#allocation2 + $0x14] sm:$0xf]
    %v113 = vld [vmem:[#allocation2 + $0x18] sm:$0xf]
    %v114 = vld [vmem:[#allocation2 + $0x1c] sm:$0xf]
    %v115 = vld [vmem:[#allocation2 + $0x20] sm:$0xf]
    %v116 = vld [vmem:[#allocation2 + $0x24] sm:$0xf]
    %v117 = vld [vmem:[#allocation2 + $0x28] sm:$0xf]
    %v118 = vld [vmem:[#allocation2 + $0x2c] sm:$0xf]
    %v119 = vld [vmem:[#allocation2 + $0x30] sm:$0xf]
    %v120 = vld [vmem:[#allocation2 + $0x34] sm:$0xf]
    %v121 = vld [vmem:[#allocation2 + $0x38] sm:$0xf]
    %v122 = vld [vmem:[#allocation2 + $0x3c] sm:$0xf]
    %v123 = vld [vmem:[%s4] sm:$0x1]
    %v125 = vperm.slane %v123, 0
    %v143 = vunpack.c.l.b16 %v107
    %v144 = vunpack.c.l.b16 %v108
    %v145 = vunpack.c.l.b16 %v109
    %v146 = vunpack.c.l.b16 %v110
    %v147 = vunpack.c.l.b16 %v111
    %v148 = vunpack.c.l.b16 %v112
    %v149 = vunpack.c.l.b16 %v113
    %v150 = vunpack.c.l.b16 %v114
    %v151 = vunpack.c.l.b16 %v115
    %v152 = vunpack.c.l.b16 %v116
    %v153 = vunpack.c.l.b16 %v117
    %v154 = vunpack.c.l.b16 %v118
    %v155 = vunpack.c.l.b16 %v119
    %v156 = vunpack.c.l.b16 %v120
    %v157 = vunpack.c.l.b16 %v121
    %v158 = vunpack.c.l.b16 %v122
    %v159 = vpack.c.b16 %v144, %v143
    %v160 = vpack.c.b16 %v146, %v145
    %v161 = vpack.c.b16 %v148, %v147
    %v162 = vpack.c.b16 %v150, %v149
    %v163 = vpack.c.b16 %v152, %v151
    %v164 = vpack.c.b16 %v154, %v153
    %v165 = vpack.c.b16 %v156, %v155
    %v166 = vpack.c.b16 %v158, %v157
    %175 = vmatpush.bf16.msra.mxu0 %v166
    %176 = vmatpush.bf16.msra.mxu0 %v165
    %177 = vmatpush.bf16.msra.mxu0 %v164
    %178 = vmatpush.bf16.msra.mxu0 %v163
    %179 = vmatpush.bf16.msra.mxu0 %v162
    %180 = vmatpush.bf16.msra.mxu0 %v161
    %181 = vmatpush.bf16.msra.mxu0 %v160
    %182 = vmatpush.bf16.msra.mxu0 %v159
    %183 = vmatmul.bf16.gmra.mxu0 %v106
    %v184 = vpop.f32.mrf.mxu0
    %v185 = vadd.f32 %v125, %v184
    %v186 = vpop.f32.mrf.mxu0
    %v187 = vadd.f32 %v125, %v186
    %188 = vdwg.mxu0
    %v189 = vmax.f32 %v185, 0.0
    %v190 = vmax.f32 %v187, 0.0
    %v191 = vpack.c.bf16 %v190, %v189
    %v192 = vld [vmem:[#allocation4] sm:$0xf]
    %v193 = vld [vmem:[#allocation4 + $0x4] sm:$0xf]
    %v194 = vld [vmem:[#allocation4 + $0x8] sm:$0xf]
    %v195 = vld [vmem:[#allocation4 + $0xc] sm:$0xf]
    %v196 = vld [vmem:[#allocation4 + $0x10] sm:$0xf]
    %v197 = vld [vmem:[#allocation4 + $0x14] sm:$0xf]
    %v198 = vld [vmem:[#allocation4 + $0x18] sm:$0xf]
    %v199 = vld [vmem:[#allocation4 + $0x1c] sm:$0xf]
    %v200 = vld [vmem:[#allocation4 + $0x20] sm:$0xf]
    %v201 = vld [vmem:[#allocation4 + $0x24] sm:$0xf]
    %v202 = vld [vmem:[#allocation4 + $0x28] sm:$0xf]
    %v203 = vld [vmem:[#allocation4 + $0x2c] sm:$0xf]
    %v204 = vld [vmem:[#allocation4 + $0x30] sm:$0xf]
    %v205 = vld [vmem:[#allocation4 + $0x34] sm:$0xf]
    %v206 = vld [vmem:[#allocation4 + $0x38] sm:$0xf]
    %v207 = vld [vmem:[#allocation4 + $0x3c] sm:$0xf]
    %v208 = vld [vmem:[%s6] sm:$0x1]
    %v210 = vperm.slane %v208, 0
    %v228 = vunpack.c.l.b16 %v192
    %v229 = vunpack.c.l.b16 %v193
    %v230 = vunpack.c.l.b16 %v194
    %v231 = vunpack.c.l.b16 %v195
    %v232 = vunpack.c.l.b16 %v196
    %v233 = vunpack.c.l.b16 %v197
    %v234 = vunpack.c.l.b16 %v198
    %v235 = vunpack.c.l.b16 %v199
    %v236 = vunpack.c.l.b16 %v200
    %v237 = vunpack.c.l.b16 %v201
    %v238 = vunpack.c.l.b16 %v202
    %v239 = vunpack.c.l.b16 %v203
    %v240 = vunpack.c.l.b16 %v204
    %v241 = vunpack.c.l.b16 %v205
    %v242 = vunpack.c.l.b16 %v206
    %v243 = vunpack.c.l.b16 %v207
    %v244 = vpack.c.b16 %v229, %v228
    %v245 = vpack.c.b16 %v231, %v230
    %v246 = vpack.c.b16 %v233, %v232
    %v247 = vpack.c.b16 %v235, %v234
    %v248 = vpack.c.b16 %v237, %v236
    %v249 = vpack.c.b16 %v239, %v238
    %v250 = vpack.c.b16 %v241, %v240
    %v251 = vpack.c.b16 %v243, %v242
    %260 = vmatpush.bf16.msra.mxu0 %v251
    %261 = vmatpush.bf16.msra.mxu0 %v250
    %262 = vmatpush.bf16.msra.mxu0 %v249
    %263 = vmatpush.bf16.msra.mxu0 %v248
    %264 = vmatpush.bf16.msra.mxu0 %v247
    %265 = vmatpush.bf16.msra.mxu0 %v246
    %266 = vmatpush.bf16.msra.mxu0 %v245
    %267 = vmatpush.bf16.msra.mxu0 %v244
    %268 = vmatmul.bf16.gmra.mxu0 %v191
    %v269 = vpop.f32.mrf.mxu0
    %v270 = vadd.f32 %v210, %v269
    %v271 = vpop.f32.mrf.mxu0
    %v272 = vadd.f32 %v210, %v271
    %273 = vdwg.mxu0
    %v274 = vlaneseq
    %v275 = vand.u32 %v274, 127
    %vm276 = vcmp.lt.s32.totalorder %v275, 16
    %v277 = vsel %vm276, %v270, -inf
    %v278 = vsel %vm276, %v272, -inf
    %279 = vmax.xlane.f32.xlu0 %v277
    %v280 = vpop.xlane.xlu0 %279
    %281 = vmax.xlane.f32.xlu0 %v278
    %v282 = vpop.xlane.xlu0 %281
    %v283 = vsub.f32 %v277, %v280
    %v284 = vsub.f32 %v278, %v282
    %v285 = vmul.f32 %v283, 1.442695
    %v286 = vpow.pop %v285
    %v287 = vmul.f32 %v284, 1.442695
    %v288 = vpow.pop %v287
    %289 = vadd.xlane.f32.xlu0 %v286
    %v290 = vpop.xlane.xlu0 %289
    %291 = vadd.xlane.f32.xlu0 %v288
    %v292 = vpop.xlane.xlu0 %291
    %v293 = vlog2.pop %v290
    %v294 = vmul.f32 %v293, 0.6931472
    %v295 = vlog2.pop %v292
    %v296 = vmul.f32 %v295, 0.6931472
    %v297 = vsub.f32 %v283, %v294
    %v298 = vsub.f32 %v284, %v296
    %v299 = vsel %vm276, %v297, 0.0
    %v300 = vsel %vm276, %v298, 0.0
    %301 = vst [vmem:[%s7] sm:$0xff] %v299
    %302 = vst [vmem:[%s7 + $0x8] sm:$0xff] %v300
    // Predicated region
    $region38: #{fused_mlp_forward.1} parent=1 // pred_check
      _
    $region39: #{fused_mlp_forward.1} parent=1 // pred_check_branch
      %304 = sbr.rel (0) target = $region41
    $region40: #{fused_mlp_forward.1} parent=1 // pred_region
      _
    $region41: #{fused_mlp_forward.1} parent=1 // pred_fallthru
      _
    // Predicated region
    $region42: #{fused_mlp_forward.1} parent=1 // pred_check
      _
    $region43: #{fused_mlp_forward.1} parent=1 // pred_check_branch
      %306 = sbr.rel (0) target = $region45
    $region44: #{fused_mlp_forward.1} parent=1 // pred_region
      _
    $region45: #{fused_mlp_forward.1} parent=1 // pred_fallthru
      _
    %307 = vsyncpa [#allocation3], 1
    %308 = vsyncpa [#allocation5], 1

</llo_original>
